<compile_context>
chip_gen: v7x
topology: tpu7x:2x2x1
jax: 0.10.0
libtpu: 0.0.40
codegen_flags: <defaults>
</compile_context>

<pallas_src>
import functools

import jax
import jax.numpy as jnp
import numpy as np
from jax import lax
from jax.experimental import pallas as pl
from jax.experimental.pallas import tpu as pltpu


# ----------------------------------------------------------------------------
# Tiny probe: pin down pltpu.roll's shift convention (vs np.roll) at runtime so
# the fused kernel's static shift amounts are always correct.
# ----------------------------------------------------------------------------
def _roll_sign() -> int:
    def k(x_ref, o_ref):
        o_ref[...] = pltpu.roll(x_ref[...], 1, 1)

    x = lax.broadcasted_iota(jnp.float32, (8, 128), 1)
    y = pl.pallas_call(
        k,
        grid=(1,),
        in_specs=[pl.BlockSpec((8, 128), lambda i: (0, 0))],
        out_specs=pl.BlockSpec((8, 128), lambda i: (0, 0)),
        out_shape=jax.ShapeDtypeStruct((8, 128), jnp.float32),
    )(x)
    # np.roll semantics: result[0, 0] == x[0, -1] == 127 ; opposite => 1
    return 1 if float(y[0, 0]) == 127.0 else -1


# ----------------------------------------------------------------------------
# Fused C3 kernel (transposed-GEMM layout: activations are (C, M), M on lanes)
# ----------------------------------------------------------------------------
def _make_c3_kernel(H, W, M_pad, c_mid, num_layer, roll_sign):
    def silu(v):
        return v * jax.nn.sigmoid(v)

    def conv1x1(a, wT, b):
        # wT: (cout, cin), a: (cin, M) -> (cout, M); bias b: (cout, 1)
        acc = jnp.dot(wT, a, preferred_element_type=jnp.float32)
        return silu(acc + b)

    def kernel(xT_ref, w_res_ref, b_res_ref, w_first_ref, b_first_ref,
               w1_ref, b1_ref, w3_ref, b3_ref, w_out_ref, b_out_ref, o_ref):
        xT = xT_ref[...]                                          # (c1, M)

        y_res = conv1x1(xT, w_res_ref[...], b_res_ref[...])       # residual branch
        y = conv1x1(xT, w_first_ref[...], b_first_ref[...])       # main branch

        # Precompute the 9 tap shifts + validity masks once (shared by all
        # bottlenecks).  Output position m=(n,h,w) needs input (h+dh, w+dw);
        # along flattened M that is a shift of dh*W+dw, masked at the image
        # border (zero padding) -- the mask also kills batch-boundary wraps.
        m_idx = lax.broadcasted_iota(jnp.int32, (c_mid, M_pad), 1)
        hh = (m_idx // W) % H
        ww = m_idx % W
        taps = []
        for dh in (-1, 0, 1):
            for dw in (-1, 0, 1):
                shift = dh * W + dw
                amt = (roll_sign * (-shift)) % M_pad              # np.roll-equivalent
                valid = ((hh + dh >= 0) & (hh + dh < H) &
                         (ww + dw >= 0) & (ww + dw < W))
                taps.append((amt, valid))

        for i in range(num_layer):                                # 3x BottleNeck
            t = conv1x1(y, w1_ref[i], b1_ref[i])                  # (c_mid, M)
            acc = jnp.zeros((c_mid, M_pad), jnp.float32)
            for tap, (amt, valid) in enumerate(taps):             # in-kernel 3x3
                t_sh = pltpu.roll(t, amt, 1) if amt else t
                t_sh = jnp.where(valid, t_sh, 0.0)
                acc = acc + jnp.dot(w3_ref[i, tap], t_sh,
                                    preferred_element_type=jnp.float32)
            y = y + silu(acc + b3_ref[i])                         # residual add

        merged = y_res + y                                        # C3 branch merge
        out = conv1x1(merged, w_out_ref[...], b_out_ref[...])     # (c2, M)
        o_ref[...] = out.astype(o_ref.dtype)

    return kernel


# ----------------------------------------------------------------------------
# Weight preparation (HWIO conv weights -> transposed-GEMM layouts)
# ----------------------------------------------------------------------------
def _prep_1x1(prm):
    # prm["w"]: (1, 1, cin, cout) -> (cout, cin); bias -> (cout, 1)
    w = prm["w"][0, 0]
    return jnp.transpose(w), prm["b"].reshape(-1, 1)


def _prep_3x3(prm):
    # prm["w"]: (3, 3, cin, cout) -> (9, cout, cin), tap = kh*3 + kw
    kh, kw, cin, cout = prm["w"].shape
    w = jnp.transpose(prm["w"], (0, 1, 3, 2)).reshape(kh * kw, cout, cin)
    return w, prm["b"].reshape(-1, 1)


# ----------------------------------------------------------------------------
# C3 forward (NCHW in / NCHW out), fully fused into one pallas_call
# ----------------------------------------------------------------------------
def c3_forward_nchw(x_nchw, params, k, s, p, *, roll_sign=1):
    assert (k, s, p) == (1, 1, 0), "fused Pallas C3 specialized to k=1,s=1,p=0 outer convs"
    # TODO(synk): general k/s/p outer convs (spatial resampling) not implemented
    # in the fused path; the example configuration uses k=1, s=1, p=0.
    N, C1, H, W = x_nchw.shape
    num_layer = len(params["bottlenecks"])
    c_mid = params["first"]["w"].shape[-1]
    c2 = params["out"]["w"].shape[-1]
    M = N * H * W
    M_pad = ((M + 127) // 128) * 128

    # Channels-first transposed layout: xT[c, n*H*W + h*W + w] (lane-dense M).
    xT = jnp.transpose(x_nchw, (1, 0, 2, 3)).reshape(C1, M)
    if M_pad != M:
        xT = jnp.pad(xT, ((0, 0), (0, M_pad - M)))

    w_res, b_res = _prep_1x1(params["res"])
    w_first, b_first = _prep_1x1(params["first"])
    w_out, b_out = _prep_1x1(params["out"])
    w1_all = jnp.stack([_prep_1x1(b1)[0] for (b1, _) in params["bottlenecks"]])
    b1_all = jnp.stack([_prep_1x1(b1)[1] for (b1, _) in params["bottlenecks"]])
    w3_all = jnp.stack([_prep_3x3(b2)[0] for (_, b2) in params["bottlenecks"]])
    b3_all = jnp.stack([_prep_3x3(b2)[1] for (_, b2) in params["bottlenecks"]])

    kernel = _make_c3_kernel(H, W, M_pad, c_mid, num_layer, roll_sign)

    def full(shape):
        return pl.BlockSpec(shape, lambda i, _s=shape: (0,) * len(_s))

    in_arrays = [xT, w_res, b_res, w_first, b_first,
                 w1_all, b1_all, w3_all, b3_all, w_out, b_out]

    oT = pl.pallas_call(
        kernel,
        grid=(1,),
        in_specs=[full(a.shape) for a in in_arrays],
        out_specs=full((c2, M_pad)),
        out_shape=jax.ShapeDtypeStruct((c2, M_pad), x_nchw.dtype),
    )(*in_arrays)

    oT = oT[:, :M]
    return jnp.transpose(oT.reshape(c2, N, H, W), (1, 0, 2, 3))


# ----------------------------------------------------------------------------
# Deterministic synthetic parameters (Conv2d + eval-mode BatchNorm folded in)
# ----------------------------------------------------------------------------
def make_convbnsilu_params(key, cin, cout, k):
    kw, kb = jax.random.split(key)
    fan_in = cin * k * k
    w = jax.random.normal(kw, (k, k, cin, cout), jnp.float32) / np.sqrt(fan_in)
    b = jax.random.normal(kb, (cout,), jnp.float32) * 0.01
    # Fold BatchNorm2d (eval: mean=0, var=1, gamma=1, beta=0, eps=1e-5)
    scale = 1.0 / np.sqrt(1.0 + 1e-5)
    return {"w": w * scale, "b": b * scale}


def make_c3_params(key, c1, c2, k, num_layer=3):
    c_mid = int(c2 / 2)
    keys = jax.random.split(key, 4 + 2 * num_layer)
    params = {
        "res": make_convbnsilu_params(keys[0], c1, c_mid, k),
        "first": make_convbnsilu_params(keys[1], c1, c_mid, k),
        "out": make_convbnsilu_params(keys[2], c_mid, c2, k),
        "bottlenecks": [],
    }
    for i in range(num_layer):
        p1 = make_convbnsilu_params(keys[3 + 2 * i], c_mid, c_mid, 1)
        p2 = make_convbnsilu_params(keys[4 + 2 * i], c_mid, c_mid, 3)
        params["bottlenecks"].append((p1, p2))
    return params


# ----------------------------------------------------------------------------
# Pure-JAX reference (NHWC) for the correctness check
# ----------------------------------------------------------------------------
def _ref_cbs(x, prm, k, s, p):
    y = lax.conv_general_dilated(
        x, prm["w"], window_strides=(s, s), padding=[(p, p), (p, p)],
        dimension_numbers=("NHWC", "HWIO", "NHWC"),
        precision=lax.Precision.HIGHEST)
    y = y + prm["b"]
    return y * jax.nn.sigmoid(y)


def c3_reference(x, params, k, s, p):
    y_res = _ref_cbs(x, params["res"], k, s, p)
    y = _ref_cbs(x, params["first"], k, s, p)
    for (p1, p2) in params["bottlenecks"]:
        t = _ref_cbs(y, p1, 1, 1, 0)
        t = _ref_cbs(t, p2, 3, 1, 1)
        y = y + t
    return _ref_cbs(y_res + y, params["out"], k, s, p)


# ----------------------------------------------------------------------------
if __name__ == "__main__":
    # C3(c1=4, c2=8, k=1, s=1, p=0, num_layer=3); input NCHW (2, 4, 16, 16)
    c1, c2, k, s, p, num_layer = 4, 8, 1, 1, 0, 3
    N, H, W = 2, 16, 16

    key = jax.random.PRNGKey(0)
    kx, kp = jax.random.split(key)
    x_nchw = jax.random.normal(kx, (N, c1, H, W), jnp.float32)
    params = make_c3_params(kp, c1, c2, k, num_layer)

    roll_sign = _roll_sign()  # one tiny probe kernel, run once

    fwd = jax.jit(functools.partial(c3_forward_nchw, k=k, s=s, p=p,
                                    roll_sign=roll_sign))
    out_nchw = fwd(x_nchw, params)
    jax.block_until_ready(out_nchw)

    # Correctness vs pure-JAX reference.
    x_nhwc = jnp.transpose(x_nchw, (0, 2, 3, 1))
    ref_nchw = jnp.transpose(c3_reference(x_nhwc, params, k, s, p), (0, 3, 1, 2))
    assert out_nchw.shape == (N, c2, H, W)
    assert jnp.allclose(out_nchw, ref_nchw, atol=2e-3, rtol=2e-3), \
        "Pallas fused C3 output mismatch vs reference"

    print("KERNEL_OK")
</pallas_src>

<mosaic_0001>
module attributes {stable_mosaic.version = 11 : i64} {
  func.func @k(%arg0: i32, %arg1: memref<8x128xf32, #tpu.memory_space<vmem>>, %arg2: memref<8x128xf32, #tpu.memory_space<vmem>>) attributes {dimension_semantics = [#tpu.dimension_semantics<arbitrary>], iteration_bounds = array<i64: 1>, scalar_prefetch = 0 : i64, scratch_operands = 0 : i64, tpu.core_type = #tpu.core_type<tc>, window_params = [{pipeline_mode = #tpu.pipeline_mode<synchronous>, transform_indices = @transform_0, window_bounds = array<i64: 8, 128>}, {pipeline_mode = #tpu.pipeline_mode<synchronous>, transform_indices = @transform_1, window_bounds = array<i64: 8, 128>}]} {
    %c0 = arith.constant 0 : index
    %c0_0 = arith.constant 0 : index
    %0 = vector.load %arg1[%c0, %c0_0] : memref<8x128xf32, #tpu.memory_space<vmem>>, vector<8x128xf32>
    %c1_i32 = arith.constant 1 : i32
    %1 = tpu.dynamic_rotate %0 by %c1_i32 dim 1 : vector<8x128xf32>, i32 -> vector<8x128xf32>
    %c0_1 = arith.constant 0 : index
    %c0_2 = arith.constant 0 : index
    %2 = vector.load %arg2[%c0_1, %c0_2] : memref<8x128xf32, #tpu.memory_space<vmem>>, vector<8x128xf32>
    tpu.vector_store %arg2[%c0_1, %c0_2], %1 {strides = array<i32>} : memref<8x128xf32, #tpu.memory_space<vmem>>, vector<8x128xf32>,
    return
  }
  func.func @transform_0(%arg0: i32) -> (i32, i32) {
    %c0_i32 = arith.constant 0 : i32
    %c0_i32_0 = arith.constant 0 : i32
    %c0_i32_1 = arith.constant 0 : i32
    return %c0_i32, %c0_i32_0 : i32, i32
  }
  func.func @transform_1(%arg0: i32) -> (i32, i32) {
    %c0_i32 = arith.constant 0 : i32
    %c0_i32_0 = arith.constant 0 : i32
    %c0_i32_1 = arith.constant 0 : i32
    return %c0_i32, %c0_i32_0 : i32, i32
  }
}

</mosaic_0001>

<llo_original>
// kernel: tpu_custom_call.1
$region0: #{tpu_custom_call.1}
  #allocation0 [shape = 'u32[]', space=smem, size = 0x4, offset = 0x4, fixed_abs, tag = 'smem constant byte address 0x4 - core index']
  #allocation1 [shape = 'u32[144,128]{1,0:T(1,128)}', space=vmem, size = 0x12000, scoped, tag = 'internal scratch']
  %s0 = inlined_call_operand.hbm [shape: f32[8,128], index: 0, kind: input, shape index: {}]
  %s1 = inlined_call_operand.hbm [shape: f32[8,128], index: 1, kind: output, shape index: {}]
  %s2 = sld [smem:[#allocation0]]
  $region18: #{tpu_custom_call.1} parent=0
    _
  %s4 = ssub.s32 1, %s2
  %s5 = scalar_select 0, %s4, %s2
  $region1: #{tpu_custom_call.1} parent=0
    #allocation2 [shape = 'u8[4096]{0}', space=vmem, size = 0x1000, scoped, tag = 'input window, operand 0, single buffered']
    #allocation3 [shape = 's32[1]{0}', space=sflag, size = 0x4, scoped, tag = 'scoped memory for tpu_custom_call.1']
    #allocation4 [shape = 's32[1]{0}', space=sflag, size = 0x4, scoped, tag = 'scoped memory for tpu_custom_call.1']
    #allocation5 [shape = 'u8[4096]{0}', space=vmem, size = 0x1000, scoped, tag = 'output window, operand 0, single buffered']
    %6 = vsyncpa [#allocation3], 0
    %7 = vsyncpa [#allocation4], 0
    // Predicated region
    $region2: #{tpu_custom_call.1} parent=1 // pred_check
      _
    $region3: #{tpu_custom_call.1} parent=1 // pred_check_branch
      %9 = sbr.rel (0) target = $region5
    $region4: #{tpu_custom_call.1} parent=1 // pred_region
      %s11 = ssub.s32 128, 128
      %12 = vsyncadd [#allocation3], %s11
      %s14 = sshll.u32 [#allocation2], 4
      %s15 = int_to_ptr.vmem [resolvable:$true] %s14
      %17 = dma.hbm_to_vmem [thread:$0]  %s0, 128, %s15, [#allocation3]
    $region5: #{tpu_custom_call.1} parent=1 // pred_fallthru
      _
    // Predicated region
    $region6: #{tpu_custom_call.1} parent=1 // pred_check
      _
    $region7: #{tpu_custom_call.1} parent=1 // pred_check_branch
      %19 = sbr.rel (0) target = $region9
    $region8: #{tpu_custom_call.1} parent=1 // pred_region
      %20 = dma.done [#allocation3], 128
    $region9: #{tpu_custom_call.1} parent=1 // pred_fallthru
      _
    %v21 = vld [vmem:[#allocation2] sm:$0xff]
    %22 = vrot.lane.b32.xlu0 %v21, 1
    %v23 = vpop.permute.xlu0 %22
    %24 = vst [vmem:[#allocation5] sm:$0xff] %v23
    // Predicated region
    $region10: #{tpu_custom_call.1} parent=1 // pred_check
      _
    $region11: #{tpu_custom_call.1} parent=1 // pred_check_branch
      %26 = sbr.rel (0) target = $region13
    $region12: #{tpu_custom_call.1} parent=1 // pred_region
      %s28 = ssub.s32 128, 128
      %29 = vsyncadd [#allocation4], %s28
      %s31 = sshll.u32 [#allocation5], 4
      %s32 = int_to_ptr.vmem [resolvable:$true] %s31
      %34 = dma.vmem_to_hbm [thread:$0]  %s32, 128, %s1, [#allocation4]
    $region13: #{tpu_custom_call.1} parent=1 // pred_fallthru
      _
    // Predicated region
    $region14: #{tpu_custom_call.1} parent=1 // pred_check
      _
    $region15: #{tpu_custom_call.1} parent=1 // pred_check_branch
      %36 = sbr.rel (0) target = $region17
    $region16: #{tpu_custom_call.1} parent=1 // pred_region
      %37 = dma.done [#allocation4], 128
    $region17: #{tpu_custom_call.1} parent=1 // pred_fallthru
      _
    %38 = vsyncpa [#allocation3], 1
    %39 = vsyncpa [#allocation4], 1

</llo_original>
